<compile_context>
chip_gen: v6e
topology: v6e:2x2x1
jax: 0.10.0
libtpu: 0.0.40
codegen_flags: <defaults>
</compile_context>

<pallas_src>
import numpy as np
import jax
import jax.numpy as jnp
from jax import lax
from jax.experimental import pallas as pl
from jax.experimental.pallas import tpu as pltpu


def value_embedding_data(d=512, split=200):
    # Faithful port of the PyTorch helper (fixed sinusoidal value embedding table).
    vec = np.array([np.arange(split) * i for i in range(d // 2)], dtype=np.float32).transpose()
    vec = vec / vec.max()
    emb = np.concatenate((np.sin(vec), np.cos(vec)), axis=1)
    emb[0, :d] = 0.0
    return jnp.asarray(emb, dtype=jnp.float32)


def prepare_lab_params(var_table, value_table, W, b):
    """One-time (offline) refold of Linear(2E->E) into the embedding tables.

    cat([var_emb, val_emb]) @ W.T + b == var_emb @ W[:, :E].T + val_emb @ W[:, E:].T + b
    and since both tables are static parameters, the two matmuls are folded into the
    tables here, outside the per-call path.
    """
    E = var_table.shape[1]
    hi = lax.Precision.HIGHEST
    fused_var = jnp.dot(var_table.astype(jnp.float32), W[:, :E].T, precision=hi)
    fused_val = jnp.dot(value_table.astype(jnp.float32), W[:, E:].T, precision=hi)
    bias = b.reshape(1, E).astype(jnp.float32)
    return fused_var.astype(jnp.float32), fused_val.astype(jnp.float32), bias


def _make_lab_gather_kernel(tn):
    def kernel(var_ids_ref, val_ids_ref, fvar_ref, fval_ref, b_ref, out_ref):
        # var_ids_ref / val_ids_ref: SMEM scalar-prefetch id arrays, shape (N_pad,) int32
        # fvar_ref: (varible_num, E) VMEM-resident fused var table
        # fval_ref: (split_num,   E) VMEM-resident fused value table
        # b_ref   : (1, E) bias
        # out_ref : (tn, E) output tile for this grid step
        base = pl.program_id(0) * tn
        bias = b_ref[...]                                  # (1, E)
        for r in range(tn):                                # tn is small & static
            vid = var_ids_ref[base + r]                    # scalar read from SMEM
            sid = val_ids_ref[base + r]
            row = (fvar_ref[pl.ds(vid, 1), :]              # (1, E) dynamic row gather
                   + fval_ref[pl.ds(sid, 1), :]
                   + bias)
            out_ref[pl.ds(r, 1), :] = row                  # lane-dense (E=128) store
    return kernel


def ehr_lab_embedding(var_ids, value_ids, fused_var, fused_val, bias, *, tn=None):
    """Pallas forward for EHR_Embedding(embed_type='lab') with pre-fused tables.

    var_ids, value_ids : (N,) integer ids
    fused_var          : (varible_num, E) f32   (= var_table   @ W[:, :E].T)
    fused_val          : (split_num,   E) f32   (= value_table @ W[:, E:].T)
    bias               : (1, E) f32
    returns            : (N, E) f32
    """
    N = int(var_ids.shape[0])
    E = fused_var.shape[1]
    if N == 0:
        # Mirrors the module's empty-input early return.
        return jnp.zeros((0, E), jnp.float32)

    if tn is None:
        tn = 8 if N <= 128 else 64                         # sublane-aligned tile of rows

    n_pad = pl.cdiv(N, tn) * tn
    # Clip ids into range: a bad id would otherwise be an unchecked OOB VMEM read
    # (PyTorch nn.Embedding would raise instead). Padded tail rows use id 0 and are sliced off.
    var_ids = jnp.clip(var_ids.astype(jnp.int32), 0, fused_var.shape[0] - 1)
    value_ids = jnp.clip(value_ids.astype(jnp.int32), 0, fused_val.shape[0] - 1)
    var_ids = jnp.pad(var_ids, (0, n_pad - N))
    value_ids = jnp.pad(value_ids, (0, n_pad - N))

    out = pl.pallas_call(
        _make_lab_gather_kernel(tn),
        out_shape=jax.ShapeDtypeStruct((n_pad, E), jnp.float32),
        grid_spec=pltpu.PrefetchScalarGridSpec(
            num_scalar_prefetch=2,
            grid=(n_pad // tn,),
            in_specs=[
                # Fused tables + bias: full blocks, constant index_map -> DMA'd once, stay in VMEM.
                pl.BlockSpec(fused_var.shape, lambda i, *_: (0, 0)),
                pl.BlockSpec(fused_val.shape, lambda i, *_: (0, 0)),
                pl.BlockSpec((1, E), lambda i, *_: (0, 0)),
            ],
            out_specs=pl.BlockSpec((tn, E), lambda i, *_: (i, 0)),
        ),
        compiler_params=pltpu.CompilerParams(
            dimension_semantics=("parallel",)),
    )(var_ids, value_ids, fused_var, fused_val, bias)
    return out[:N]


def ehr_lab_embedding_ref(var_ids, value_ids, var_table, value_table, W, b):
    # Original (un-fused) formulation as the numerical reference.
    cat = jnp.concatenate([var_table[var_ids], value_table[value_ids]], axis=1)
    return jnp.dot(cat, W.T, precision=lax.Precision.HIGHEST) + b


if __name__ == "__main__":
    # Small shapes consistent with the module: embed_size=E, split_num=200 value bins,
    # varible_num lab variables, N (var, value) pairs for one patient at one timestamp.
    E = 128
    SPLIT = 200
    VARIBLE_NUM = 16
    N = 10   # not a multiple of the tile -> exercises the padding path

    key = jax.random.PRNGKey(0)
    k_tab, k_w, k_b, k_var, k_val = jax.random.split(key, 5)

    # Deterministic parameter init (synthetic, mirrors nn.Embedding / nn.Linear shapes).
    var_table = jax.random.normal(k_tab, (VARIBLE_NUM, E), dtype=jnp.float32) * 0.02
    value_table = value_embedding_data(E, SPLIT)                       # (SPLIT, E), fixed
    W = jax.random.normal(k_w, (E, 2 * E), dtype=jnp.float32) * 0.02   # Linear(2E -> E) weight
    b = jax.random.normal(k_b, (E,), dtype=jnp.float32) * 0.02

    # One-time parameter refold (hoisted out of the per-call path).
    fused_var, fused_val, bias = prepare_lab_params(var_table, value_table, W, b)
    fused_var, fused_val, bias = jax.block_until_ready((fused_var, fused_val, bias))

    # Deterministic example inputs: N (var, value) pairs.
    var_ids = jax.random.randint(k_var, (N,), 0, VARIBLE_NUM, dtype=jnp.int32)
    value_ids = jax.random.randint(k_val, (N,), 0, SPLIT, dtype=jnp.int32)

    # Jit the per-call wrapper so the id clip/pad prep fuses with the kernel launch.
    lab_embed = jax.jit(lambda vi, si: ehr_lab_embedding(vi, si, fused_var, fused_val, bias))

    out = lab_embed(var_ids, value_ids)
    out = jax.block_until_ready(out)

    ref = ehr_lab_embedding_ref(var_ids, value_ids, var_table, value_table, W, b)
    np.testing.assert_allclose(np.asarray(out), np.asarray(ref), rtol=2e-5, atol=2e-5)

    print("KERNEL_OK")
</pallas_src>

<mosaic_0001>
module attributes {stable_mosaic.version = 11 : i64} {
  func.func @kernel(%arg0: i32, %arg1: memref<16xi32, #tpu.memory_space<smem>>, %arg2: memref<16xi32, #tpu.memory_space<smem>>, %arg3: memref<16x128xf32, #tpu.memory_space<vmem>>, %arg4: memref<200x128xf32, #tpu.memory_space<vmem>>, %arg5: memref<1x128xf32, #tpu.memory_space<vmem>>, %arg6: memref<8x128xf32, #tpu.memory_space<vmem>>) attributes {dimension_semantics = [#tpu.dimension_semantics<parallel>], iteration_bounds = array<i64: 2>, scalar_prefetch = 2 : i64, scratch_operands = 0 : i64, tpu.core_type = #tpu.core_type<tc>, window_params = [{pipeline_mode = #tpu.pipeline_mode<synchronous>, transform_indices = @transform_0, window_bounds = array<i64: 16, 128>}, {pipeline_mode = #tpu.pipeline_mode<synchronous>, transform_indices = @transform_1, window_bounds = array<i64: 200, 128>}, {pipeline_mode = #tpu.pipeline_mode<synchronous>, transform_indices = @transform_2, window_bounds = array<i64: 1, 128>}, {transform_indices = @transform_3, window_bounds = array<i64: 8, 128>}]} {
    %c8_i32 = arith.constant 8 : i32
    %0 = arith.muli %arg0, %c8_i32 : i32
    %c0 = arith.constant 0 : index
    %c0_0 = arith.constant 0 : index
    %1 = vector.load %arg5[%c0, %c0_0] : memref<1x128xf32, #tpu.memory_space<vmem>>, vector<1x128xf32>
    %c0_i32 = arith.constant 0 : i32
    %2 = arith.addi %0, %c0_i32 : i32
    %3 = arith.index_cast %2 : i32 to index
    %4 = memref.load %arg1[%3] : memref<16xi32, #tpu.memory_space<smem>>
    %c0_i32_1 = arith.constant 0 : i32
    %5 = arith.addi %0, %c0_i32_1 : i32
    %6 = arith.index_cast %5 : i32 to index
    %7 = memref.load %arg2[%6] : memref<16xi32, #tpu.memory_space<smem>>
    %8 = arith.index_cast %4 : i32 to index
    %c0_2 = arith.constant 0 : index
    %9 = vector.load %arg3[%8, %c0_2] : memref<16x128xf32, #tpu.memory_space<vmem>>, vector<1x128xf32>
    %10 = arith.index_cast %7 : i32 to index
    %c0_3 = arith.constant 0 : index
    %11 = vector.load %arg4[%10, %c0_3] : memref<200x128xf32, #tpu.memory_space<vmem>>, vector<1x128xf32>
    %12 = arith.addf %9, %11 : vector<1x128xf32>
    %13 = arith.addf %12, %1 : vector<1x128xf32>
    %c0_4 = arith.constant 0 : index
    %c0_5 = arith.constant 0 : index
    %14 = vector.load %arg6[%c0_4, %c0_5] : memref<8x128xf32, #tpu.memory_space<vmem>>, vector<1x128xf32>
    tpu.vector_store %arg6[%c0_4, %c0_5], %13 {strides = array<i32>} : memref<8x128xf32, #tpu.memory_space<vmem>>, vector<1x128xf32>,
    %c1_i32 = arith.constant 1 : i32
    %15 = arith.addi %0, %c1_i32 : i32
    %16 = arith.index_cast %15 : i32 to index
    %17 = memref.load %arg1[%16] : memref<16xi32, #tpu.memory_space<smem>>
    %c1_i32_6 = arith.constant 1 : i32
    %18 = arith.addi %0, %c1_i32_6 : i32
    %19 = arith.index_cast %18 : i32 to index
    %20 = memref.load %arg2[%19] : memref<16xi32, #tpu.memory_space<smem>>
    %21 = arith.index_cast %17 : i32 to index
    %c0_7 = arith.constant 0 : index
    %22 = vector.load %arg3[%21, %c0_7] : memref<16x128xf32, #tpu.memory_space<vmem>>, vector<1x128xf32>
    %23 = arith.index_cast %20 : i32 to index
    %c0_8 = arith.constant 0 : index
    %24 = vector.load %arg4[%23, %c0_8] : memref<200x128xf32, #tpu.memory_space<vmem>>, vector<1x128xf32>
    %25 = arith.addf %22, %24 : vector<1x128xf32>
    %26 = arith.addf %25, %1 : vector<1x128xf32>
    %c1 = arith.constant 1 : index
    %c0_9 = arith.constant 0 : index
    %27 = vector.load %arg6[%c1, %c0_9] : memref<8x128xf32, #tpu.memory_space<vmem>>, vector<1x128xf32>
    tpu.vector_store %arg6[%c1, %c0_9], %26 {strides = array<i32>} : memref<8x128xf32, #tpu.memory_space<vmem>>, vector<1x128xf32>,
    %c2_i32 = arith.constant 2 : i32
    %28 = arith.addi %0, %c2_i32 : i32
    %29 = arith.index_cast %28 : i32 to index
    %30 = memref.load %arg1[%29] : memref<16xi32, #tpu.memory_space<smem>>
    %c2_i32_10 = arith.constant 2 : i32
    %31 = arith.addi %0, %c2_i32_10 : i32
    %32 = arith.index_cast %31 : i32 to index
    %33 = memref.load %arg2[%32] : memref<16xi32, #tpu.memory_space<smem>>
    %34 = arith.index_cast %30 : i32 to index
    %c0_11 = arith.constant 0 : index
    %35 = vector.load %arg3[%34, %c0_11] : memref<16x128xf32, #tpu.memory_space<vmem>>, vector<1x128xf32>
    %36 = arith.index_cast %33 : i32 to index
    %c0_12 = arith.constant 0 : index
    %37 = vector.load %arg4[%36, %c0_12] : memref<200x128xf32, #tpu.memory_space<vmem>>, vector<1x128xf32>
    %38 = arith.addf %35, %37 : vector<1x128xf32>
    %39 = arith.addf %38, %1 : vector<1x128xf32>
    %c2 = arith.constant 2 : index
    %c0_13 = arith.constant 0 : index
    %40 = vector.load %arg6[%c2, %c0_13] : memref<8x128xf32, #tpu.memory_space<vmem>>, vector<1x128xf32>
    tpu.vector_store %arg6[%c2, %c0_13], %39 {strides = array<i32>} : memref<8x128xf32, #tpu.memory_space<vmem>>, vector<1x128xf32>,
    %c3_i32 = arith.constant 3 : i32
    %41 = arith.addi %0, %c3_i32 : i32
    %42 = arith.index_cast %41 : i32 to index
    %43 = memref.load %arg1[%42] : memref<16xi32, #tpu.memory_space<smem>>
    %c3_i32_14 = arith.constant 3 : i32
    %44 = arith.addi %0, %c3_i32_14 : i32
    %45 = arith.index_cast %44 : i32 to index
    %46 = memref.load %arg2[%45] : memref<16xi32, #tpu.memory_space<smem>>
    %47 = arith.index_cast %43 : i32 to index
    %c0_15 = arith.constant 0 : index
    %48 = vector.load %arg3[%47, %c0_15] : memref<16x128xf32, #tpu.memory_space<vmem>>, vector<1x128xf32>
    %49 = arith.index_cast %46 : i32 to index
    %c0_16 = arith.constant 0 : index
    %50 = vector.load %arg4[%49, %c0_16] : memref<200x128xf32, #tpu.memory_space<vmem>>, vector<1x128xf32>
    %51 = arith.addf %48, %50 : vector<1x128xf32>
    %52 = arith.addf %51, %1 : vector<1x128xf32>
    %c3 = arith.constant 3 : index
    %c0_17 = arith.constant 0 : index
    %53 = vector.load %arg6[%c3, %c0_17] : memref<8x128xf32, #tpu.memory_space<vmem>>, vector<1x128xf32>
    tpu.vector_store %arg6[%c3, %c0_17], %52 {strides = array<i32>} : memref<8x128xf32, #tpu.memory_space<vmem>>, vector<1x128xf32>,
    %c4_i32 = arith.constant 4 : i32
    %54 = arith.addi %0, %c4_i32 : i32
    %55 = arith.index_cast %54 : i32 to index
    %56 = memref.load %arg1[%55] : memref<16xi32, #tpu.memory_space<smem>>
    %c4_i32_18 = arith.constant 4 : i32
    %57 = arith.addi %0, %c4_i32_18 : i32
    %58 = arith.index_cast %57 : i32 to index
    %59 = memref.load %arg2[%58] : memref<16xi32, #tpu.memory_space<smem>>
    %60 = arith.index_cast %56 : i32 to index
    %c0_19 = arith.constant 0 : index
    %61 = vector.load %arg3[%60, %c0_19] : memref<16x128xf32, #tpu.memory_space<vmem>>, vector<1x128xf32>
    %62 = arith.index_cast %59 : i32 to index
    %c0_20 = arith.constant 0 : index
    %63 = vector.load %arg4[%62, %c0_20] : memref<200x128xf32, #tpu.memory_space<vmem>>, vector<1x128xf32>
    %64 = arith.addf %61, %63 : vector<1x128xf32>
    %65 = arith.addf %64, %1 : vector<1x128xf32>
    %c4 = arith.constant 4 : index
    %c0_21 = arith.constant 0 : index
    %66 = vector.load %arg6[%c4, %c0_21] : memref<8x128xf32, #tpu.memory_space<vmem>>, vector<1x128xf32>
    tpu.vector_store %arg6[%c4, %c0_21], %65 {strides = array<i32>} : memref<8x128xf32, #tpu.memory_space<vmem>>, vector<1x128xf32>,
    %c5_i32 = arith.constant 5 : i32
    %67 = arith.addi %0, %c5_i32 : i32
    %68 = arith.index_cast %67 : i32 to index
    %69 = memref.load %arg1[%68] : memref<16xi32, #tpu.memory_space<smem>>
    %c5_i32_22 = arith.constant 5 : i32
    %70 = arith.addi %0, %c5_i32_22 : i32
    %71 = arith.index_cast %70 : i32 to index
    %72 = memref.load %arg2[%71] : memref<16xi32, #tpu.memory_space<smem>>
    %73 = arith.index_cast %69 : i32 to index
    %c0_23 = arith.constant 0 : index
    %74 = vector.load %arg3[%73, %c0_23] : memref<16x128xf32, #tpu.memory_space<vmem>>, vector<1x128xf32>
    %75 = arith.index_cast %72 : i32 to index
    %c0_24 = arith.constant 0 : index
    %76 = vector.load %arg4[%75, %c0_24] : memref<200x128xf32, #tpu.memory_space<vmem>>, vector<1x128xf32>
    %77 = arith.addf %74, %76 : vector<1x128xf32>
    %78 = arith.addf %77, %1 : vector<1x128xf32>
    %c5 = arith.constant 5 : index
    %c0_25 = arith.constant 0 : index
    %79 = vector.load %arg6[%c5, %c0_25] : memref<8x128xf32, #tpu.memory_space<vmem>>, vector<1x128xf32>
    tpu.vector_store %arg6[%c5, %c0_25], %78 {strides = array<i32>} : memref<8x128xf32, #tpu.memory_space<vmem>>, vector<1x128xf32>,
    %c6_i32 = arith.constant 6 : i32
    %80 = arith.addi %0, %c6_i32 : i32
    %81 = arith.index_cast %80 : i32 to index
    %82 = memref.load %arg1[%81] : memref<16xi32, #tpu.memory_space<smem>>
    %c6_i32_26 = arith.constant 6 : i32
    %83 = arith.addi %0, %c6_i32_26 : i32
    %84 = arith.index_cast %83 : i32 to index
    %85 = memref.load %arg2[%84] : memref<16xi32, #tpu.memory_space<smem>>
    %86 = arith.index_cast %82 : i32 to index
    %c0_27 = arith.constant 0 : index
    %87 = vector.load %arg3[%86, %c0_27] : memref<16x128xf32, #tpu.memory_space<vmem>>, vector<1x128xf32>
    %88 = arith.index_cast %85 : i32 to index
    %c0_28 = arith.constant 0 : index
    %89 = vector.load %arg4[%88, %c0_28] : memref<200x128xf32, #tpu.memory_space<vmem>>, vector<1x128xf32>
    %90 = arith.addf %87, %89 : vector<1x128xf32>
    %91 = arith.addf %90, %1 : vector<1x128xf32>
    %c6 = arith.constant 6 : index
    %c0_29 = arith.constant 0 : index
    %92 = vector.load %arg6[%c6, %c0_29] : memref<8x128xf32, #tpu.memory_space<vmem>>, vector<1x128xf32>
    tpu.vector_store %arg6[%c6, %c0_29], %91 {strides = array<i32>} : memref<8x128xf32, #tpu.memory_space<vmem>>, vector<1x128xf32>,
    %c7_i32 = arith.constant 7 : i32
    %93 = arith.addi %0, %c7_i32 : i32
    %94 = arith.index_cast %93 : i32 to index
    %95 = memref.load %arg1[%94] : memref<16xi32, #tpu.memory_space<smem>>
    %c7_i32_30 = arith.constant 7 : i32
    %96 = arith.addi %0, %c7_i32_30 : i32
    %97 = arith.index_cast %96 : i32 to index
    %98 = memref.load %arg2[%97] : memref<16xi32, #tpu.memory_space<smem>>
    %99 = arith.index_cast %95 : i32 to index
    %c0_31 = arith.constant 0 : index
    %100 = vector.load %arg3[%99, %c0_31] : memref<16x128xf32, #tpu.memory_space<vmem>>, vector<1x128xf32>
    %101 = arith.index_cast %98 : i32 to index
    %c0_32 = arith.constant 0 : index
    %102 = vector.load %arg4[%101, %c0_32] : memref<200x128xf32, #tpu.memory_space<vmem>>, vector<1x128xf32>
    %103 = arith.addf %100, %102 : vector<1x128xf32>
    %104 = arith.addf %103, %1 : vector<1x128xf32>
    %c7 = arith.constant 7 : index
    %c0_33 = arith.constant 0 : index
    %105 = vector.load %arg6[%c7, %c0_33] : memref<8x128xf32, #tpu.memory_space<vmem>>, vector<1x128xf32>
    tpu.vector_store %arg6[%c7, %c0_33], %104 {strides = array<i32>} : memref<8x128xf32, #tpu.memory_space<vmem>>, vector<1x128xf32>,
    return
  }
  func.func @transform_0(%arg0: i32, %arg1: memref<16xi32, #tpu.memory_space<smem>>, %arg2: memref<16xi32, #tpu.memory_space<smem>>) -> (i32, i32) {
    %c0_i32 = arith.constant 0 : i32
    %c0_i32_0 = arith.constant 0 : i32
    %c0_i32_1 = arith.constant 0 : i32
    return %c0_i32, %c0_i32_0 : i32, i32
  }
  func.func @transform_1(%arg0: i32, %arg1: memref<16xi32, #tpu.memory_space<smem>>, %arg2: memref<16xi32, #tpu.memory_space<smem>>) -> (i32, i32) {
    %c0_i32 = arith.constant 0 : i32
    %c0_i32_0 = arith.constant 0 : i32
    %c0_i32_1 = arith.constant 0 : i32
    return %c0_i32, %c0_i32_0 : i32, i32
  }
  func.func @transform_2(%arg0: i32, %arg1: memref<16xi32, #tpu.memory_space<smem>>, %arg2: memref<16xi32, #tpu.memory_space<smem>>) -> (i32, i32) {
    %c0_i32 = arith.constant 0 : i32
    %c0_i32_0 = arith.constant 0 : i32
    %c0_i32_1 = arith.constant 0 : i32
    return %c0_i32, %c0_i32_0 : i32, i32
  }
  func.func @transform_3(%arg0: i32, %arg1: memref<16xi32, #tpu.memory_space<smem>>, %arg2: memref<16xi32, #tpu.memory_space<smem>>) -> (i32, i32) {
    %c0_i32 = arith.constant 0 : i32
    %c0_i32_0 = arith.constant 0 : i32
    return %arg0, %c0_i32 : i32, i32
  }
}

</mosaic_0001>

<llo_original>
// kernel: _lambda_.1
$region0: #{_lambda_.1}
  #allocation0 [shape = 'u32[]', space=smem, size = 0x4, offset = 0x4, fixed_abs, tag = 'smem constant byte address 0x4 - core index']
  #allocation1 [shape = 'u32[144,128]{1,0:T(1,128)}', space=vmem, size = 0x12000, scoped, tag = 'internal scratch']
  #allocation2 [shape = 's32[1]{0}', space=sflag, size = 0x4, scoped, tag = 'scoped memory for _lambda_.1']
  #allocation3 [shape = 'u8[512]{0}', space=smem, size = 0x200, scoped, tag = 'prefetched SMEM operand 0']
  #allocation4 [shape = 'u8[512]{0}', space=smem, size = 0x200, scoped, tag = 'prefetched SMEM operand 1']
  %s0 = inlined_call_operand.vmem [shape: s32[16], index: 0, kind: input, shape index: {}]
  %s1 = inlined_call_operand.vmem [shape: s32[16], index: 1, kind: input, shape index: {}]
  %s2 = inlined_call_operand.hbm [shape: f32[16,128], index: 2, kind: input, shape index: {}]
  %s3 = inlined_call_operand.hbm [shape: f32[200,128], index: 3, kind: input, shape index: {}]
  %s4 = inlined_call_operand.vmem [shape: f32[1,128], index: 4, kind: input, shape index: {}]
  %s5 = inlined_call_operand.hbm [shape: f32[16,128], index: 5, kind: output, shape index: {}]
  %s6 = sld [smem:[#allocation0]]
  $region53: #{_lambda_.1} parent=0
    _
  %s8 = ssub.s32 1, %s6
  %s9 = scalar_select 0, %s8, %s6
  %s10 = sshll.u32 %s0, 4
  %s11 = int_to_ptr.vmem [resolvable:$true] %s10
  %13 = dma.vmem_to_smem %s11, 16, [#allocation3], [#allocation2]
  %s14 = sshll.u32 %s1, 4
  %s15 = int_to_ptr.vmem [resolvable:$true] %s14
  %17 = dma.vmem_to_smem %s15, 16, [#allocation4], [#allocation2]
  %18 = dma.done [#allocation2], 32
  %19 = sfence
  $region1: #{_lambda_.1} parent=0
    #allocation5 [shape = 'u8[8192]{0}', space=vmem, size = 0x2000, scoped, tag = 'input window, operand 2, single buffered']
    #allocation6 [shape = 's32[2]{0}', space=sflag, size = 0x8, scoped, tag = 'scoped memory for _lambda_.1']
    #allocation7 [shape = 's32[2]{0}', space=sflag, size = 0x8, scoped, tag = 'scoped memory for _lambda_.1']
    #allocation8 [shape = 'u8[102400]{0}', space=vmem, size = 0x19000, scoped, tag = 'input window, operand 3, single buffered']
    #allocation9 [shape = 's32[1]{0}', space=sflag, size = 0x4, scoped, tag = 'scoped memory for _lambda_.1']
    #allocation10 [shape = 'u8[8192]{0}', space=vmem, size = 0x2000, scoped, tag = 'output window, operand 0']
    %20 = vsyncpa [#allocation6], 0
    %21 = vsyncpa [#allocation9], 0
    %22 = vsyncpa [#allocation7], 0
    %s23 = scalar_lea.sflag [#allocation7], 1
    %24 = vsyncpa %s23, 0
    loop: start=0, step=1, limit=4
    $region2: #{_lambda_.1} parent=1 // loop_pre_header
      _
    $region3: #{_lambda_.1} parent=1 // loop_header
      %s26 = sphi 0, %s30
      %p27 = scmp.ge.s32.totalorder %s26, 4
      %s34 = sphi 0, %s34
      %s36 = sphi 0, %s34
      %s37 = sphi 0, %s36
      %s51 = sphi 0, %s37
      %s55 = sphi 0, %s55
      %s57 = sphi 0, %s55
      %s58 = sphi 0, %s57
      %s72 = sphi 0, %s58
      %s76 = sphi 0, %s76
      %s78 = sphi 0, %s76
      %s79 = sphi 0, %s78
      %s93 = sphi 0, %s79
      %s99 = sphi 0, %s101
      %s102 = sphi 0, %s99
      %s103 = sphi 0, %s102
      %s119 = sphi 0, %s103
    $region4: #{_lambda_.1} parent=1 // loop_header_branch
      %29 = sbr.rel (%p27) target = $region8
    $region5: #{_lambda_.1} parent=1 // loop_body
      %s31 = ssub.s32 %s26, 1
      %s32 = ssub.s32 %s26, 2
      %s33 = sadd.s32 %s26, 1
      %s35 = sadd.s32 %s34, 1
      %p38 = scmp.eq.s32.totalorder %s26, 1
      %p39 = scmp.ne.s32.totalorder %s34, %s36
      %p40 = scmp.eq.s32.totalorder %s26, 0
      %p41 = por %p39, %p40
      %p42 = scmp.ne.s32.totalorder %s34, %s36
      %p43 = scmp.eq.s32.totalorder %s31, 1
      %p44 = por %p42, %p43
      %p45 = scmp.ne.s32.totalorder %s36, %s37
      %p46 = scmp.eq.s32.totalorder %s31, 0
      %p47 = por %p45, %p46
      %p48 = scmp.ne.s32.totalorder %s36, %s37
      %p49 = scmp.eq.s32.totalorder %s32, 1
      %p50 = por %p48, %p49
      %p52 = scmp.ne.s32.totalorder %s37, %s51
      %p53 = scmp.eq.s32.totalorder %s32, 0
      %p54 = por %p52, %p53
      %s56 = sadd.s32 %s55, 1
      %p59 = scmp.eq.s32.totalorder %s26, 1
      %p60 = scmp.ne.s32.totalorder %s55, %s57
      %p61 = scmp.eq.s32.totalorder %s26, 0
      %p62 = por %p60, %p61
      %p63 = scmp.ne.s32.totalorder %s55, %s57
      %p64 = scmp.eq.s32.totalorder %s31, 1
      %p65 = por %p63, %p64
      %p66 = scmp.ne.s32.totalorder %s57, %s58
      %p67 = scmp.eq.s32.totalorder %s31, 0
      %p68 = por %p66, %p67
      %p69 = scmp.ne.s32.totalorder %s57, %s58
      %p70 = scmp.eq.s32.totalorder %s32, 1
      %p71 = por %p69, %p70
      %p73 = scmp.ne.s32.totalorder %s58, %s72
      %p74 = scmp.eq.s32.totalorder %s32, 0
      %p75 = por %p73, %p74
      %s77 = sadd.s32 %s76, 1
      %p80 = scmp.eq.s32.totalorder %s26, 1
      %p81 = scmp.ne.s32.totalorder %s76, %s78
      %p82 = scmp.eq.s32.totalorder %s26, 0
      %p83 = por %p81, %p82
      %p84 = scmp.ne.s32.totalorder %s76, %s78
      %p85 = scmp.eq.s32.totalorder %s31, 1
      %p86 = por %p84, %p85
      %p87 = scmp.ne.s32.totalorder %s78, %s79
      %p88 = scmp.eq.s32.totalorder %s31, 0
      %p89 = por %p87, %p88
      %p90 = scmp.ne.s32.totalorder %s78, %s79
      %p91 = scmp.eq.s32.totalorder %s32, 1
      %p92 = por %p90, %p91
      %p94 = scmp.ne.s32.totalorder %s79, %s93
      %p95 = scmp.eq.s32.totalorder %s32, 0
      %p96 = por %p94, %p95
      %s97 = ssub.s32 %s26, %s33
      %p98 = scmp.eq.s32.totalorder %s97, 0
      %s100 = sadd.s32 %s99, 1
      %s101 = scalar_select %p98, %s99, %s100
      %p104 = pneg %p98
      %p105 = scmp.eq.s32.totalorder %s26, 1
      %p106 = por %p104, %p105
      %p107 = scmp.ne.s32.totalorder %s99, %s102
      %p108 = scmp.eq.s32.totalorder %s26, 0
      %p109 = por %p107, %p108
      %p110 = scmp.ne.s32.totalorder %s99, %s102
      %p111 = scmp.eq.s32.totalorder %s31, 1
      %p112 = por %p110, %p111
      %p113 = scmp.ne.s32.totalorder %s102, %s103
      %p114 = scmp.eq.s32.totalorder %s31, 0
      %p115 = por %p113, %p114
      %p116 = scmp.ne.s32.totalorder %s102, %s103
      %p117 = scmp.eq.s32.totalorder %s32, 1
      %p118 = por %p116, %p117
      %p120 = scmp.ne.s32.totalorder %s103, %s119
      %p121 = scmp.eq.s32.totalorder %s32, 0
      %p122 = por %p120, %p121
      %p123 = scmp.le.s32.totalorder 1, %s26
      %p124 = scmp.lt.s32.totalorder %s26, 3
      %p125 = pnand %p123, %p124
      %p126 = pneg %p125
      // Predicated region
      $region9: #{_lambda_.1} parent=5 // pred_check
        _
      $region10: #{_lambda_.1} parent=5 // pred_check_branch
        %128 = sbr.rel (%p125) target = $region12
      $region11: #{_lambda_.1} parent=5 // pred_region
        %s129 = ssub.s32 %s26, 1
        // Predicated region
        $region13: #{_lambda_.1} parent=11 // pred_check
          %p130 = pneg %p47
        $region14: #{_lambda_.1} parent=11 // pred_check_branch
          %132 = sbr.rel (%p130) target = $region16
        $region15: #{_lambda_.1} parent=11 // pred_region
          %s134 = ssub.s32 256, 256
          %135 = vsyncadd [#allocation6], %s134
          %s136 = sshll.u32 [#allocation5], 4
          %s137 = int_to_ptr.vmem [resolvable:$true] %s136
          %142 = dma.hbm_to_vmem [thread:$0]  %s2, 256, %s137, [#allocation6], 128, 128, 8
        $region16: #{_lambda_.1} parent=11 // pred_fallthru
          _
        // Predicated region
        $region17: #{_lambda_.1} parent=11 // pred_check
          %p143 = pneg %p68
        $region18: #{_lambda_.1} parent=11 // pred_check_branch
          %145 = sbr.rel (%p143) target = $region20
        $region19: #{_lambda_.1} parent=11 // pred_region
          %s147 = ssub.s32 3200, 3200
          %148 = vsyncadd [#allocation9], %s147
          %s149 = sshll.u32 [#allocation8], 4
          %s150 = int_to_ptr.vmem [resolvable:$true] %s149
          %155 = dma.hbm_to_vmem [thread:$0]  %s3, 3200, %s150, [#allocation9], 128, 128, 8
        $region20: #{_lambda_.1} parent=11 // pred_fallthru
          _
        // Predicated region
        $region21: #{_lambda_.1} parent=11 // pred_check
          %p156 = pneg %p89
        $region22: #{_lambda_.1} parent=11 // pred_check_branch
          %158 = sbr.rel (%p156) target = $region24
        $region23: #{_lambda_.1} parent=11 // pred_region
          _
        $region24: #{_lambda_.1} parent=11 // pred_fallthru
          _
      $region12: #{_lambda_.1} parent=5 // pred_fallthru
        _
      %p159 = scmp.lt.s32.totalorder %s26, 2
      // Predicated region
      $region25: #{_lambda_.1} parent=5 // pred_check
        %p160 = pneg %p159
      $region26: #{_lambda_.1} parent=5 // pred_check_branch
        %162 = sbr.rel (%p160) target = $region28
      $region27: #{_lambda_.1} parent=5 // pred_region
        _
      $region28: #{_lambda_.1} parent=5 // pred_fallthru
        _
      %p163 = scmp.le.s32.totalorder 1, %s26
      %p164 = scmp.lt.s32.totalorder %s26, 3
      %p165 = pnand %p163, %p164
      %p166 = pneg %p165
      // Predicated region
      $region29: #{_lambda_.1} parent=5 // pred_check
        _
      $region30: #{_lambda_.1} parent=5 // pred_check_branch
        %168 = sbr.rel (%p165) target = $region32
      $region31: #{_lambda_.1} parent=5 // pred_region
        %s169 = ssub.s32 %s26, 1
        // Predicated region
        $region33: #{_lambda_.1} parent=31 // pred_check
          %p170 = pneg %p47
        $region34: #{_lambda_.1} parent=31 // pred_check_branch
          %172 = sbr.rel (%p170) target = $region36
        $region35: #{_lambda_.1} parent=31 // pred_region
          %173 = dma.done [#allocation6], 256
        $region36: #{_lambda_.1} parent=31 // pred_fallthru
          _
        // Predicated region
        $region37: #{_lambda_.1} parent=31 // pred_check
          %p174 = pneg %p68
        $region38: #{_lambda_.1} parent=31 // pred_check_branch
          %176 = sbr.rel (%p174) target = $region40
        $region39: #{_lambda_.1} parent=31 // pred_region
          %177 = dma.done [#allocation9], 3200
        $region40: #{_lambda_.1} parent=31 // pred_fallthru
          _
        %p178 = pneg %p47
        %p179 = pneg %p44
        %p180 = pneg %p68
        %p181 = pneg %p65
        %p182 = pneg %p89
        %p183 = pneg %p86
        %p184 = pneg %p115
        %p185 = pneg %p112
        %s186 = sand.u32 %s102, 1
        %s187 = scalar_lea.sflag [#allocation7], %s186
        %s188 = sand.u32 %s102, 1
        %s189 = smul.addr %s188, 8
        %s190 = scalar_lea.vmem [#allocation10], %s189
        %s191 = smul.u32 %s31, 8
        %v192 = vld [vmem:[%s4] sm:$0x1]
        %s193 = sld [smem:[#allocation3 + %s191]]
        %s194 = sld [smem:[#allocation4 + %s191]]
        %s195 = scalar_lea.vmem [#allocation5], %s193
        %v196 = vld [vmem:[%s195] sm:$0x1]
        %s197 = scalar_lea.vmem [#allocation8], %s194
        %v198 = vld [vmem:[%s197] sm:$0x1]
        %v199 = vadd.f32 %v196, %v198
        %v200 = vadd.f32 %v199, %v192
        %201 = vst [vmem:[%s190] sm:$0x1] %v200
        %s202 = sadd.s32 %s191, 1
        %s203 = sld [smem:[#allocation3 + %s202]]
        %s204 = sld [smem:[#allocation4 + %s202]]
        %s205 = scalar_lea.vmem [#allocation5], %s203
        %v206 = vld [vmem:[%s205] sm:$0x1]
        %s207 = scalar_lea.vmem [#allocation8], %s204
        %v208 = vld [vmem:[%s207] sm:$0x1]
        %v209 = vadd.f32 %v206, %v208
        %v210 = vadd.f32 %v209, %v192
        %211 = vst [vmem:[%s190 + $0x1] sm:$0x1] %v210
        %s212 = sadd.s32 %s191, 2
        %s213 = sld [smem:[#allocation3 + %s212]]
        %s214 = sld [smem:[#allocation4 + %s212]]
        %s215 = scalar_lea.vmem [#allocation5], %s213
        %v216 = vld [vmem:[%s215] sm:$0x1]
        %s217 = scalar_lea.vmem [#allocation8], %s214
        %v218 = vld [vmem:[%s217] sm:$0x1]
        %v219 = vadd.f32 %v216, %v218
        %v220 = vadd.f32 %v219, %v192
        %221 = vst [vmem:[%s190 + $0x2] sm:$0x1] %v220
        %s222 = sadd.s32 %s191, 3
        %s223 = sld [smem:[#allocation3 + %s222]]
        %s224 = sld [smem:[#allocation4 + %s222]]
        %s225 = scalar_lea.vmem [#allocation5], %s223
        %v226 = vld [vmem:[%s225] sm:$0x1]
        %s227 = scalar_lea.vmem [#allocation8], %s224
        %v228 = vld [vmem:[%s227] sm:$0x1]
        %v229 = vadd.f32 %v226, %v228
        %v230 = vadd.f32 %v229, %v192
        %231 = vst [vmem:[%s190 + $0x3] sm:$0x1] %v230
        %s232 = sadd.s32 %s191, 4
        %s233 = sld [smem:[#allocation3 + %s232]]
        %s234 = sld [smem:[#allocation4 + %s232]]
        %s235 = scalar_lea.vmem [#allocation5], %s233
        %v236 = vld [vmem:[%s235] sm:$0x1]
        %s237 = scalar_lea.vmem [#allocation8], %s234
        %v238 = vld [vmem:[%s237] sm:$0x1]
        %v239 = vadd.f32 %v236, %v238
        %v240 = vadd.f32 %v239, %v192
        %241 = vst [vmem:[%s190 + $0x4] sm:$0x1] %v240
        %s242 = sadd.s32 %s191, 5
        %s243 = sld [smem:[#allocation3 + %s242]]
        %s244 = sld [smem:[#allocation4 + %s242]]
        %s245 = scalar_lea.vmem [#allocation5], %s243
        %v246 = vld [vmem:[%s245] sm:$0x1]
        %s247 = scalar_lea.vmem [#allocation8], %s244
        %v248 = vld [vmem:[%s247] sm:$0x1]
        %v249 = vadd.f32 %v246, %v248
        %v250 = vadd.f32 %v249, %v192
        %251 = vst [vmem:[%s190 + $0x5] sm:$0x1] %v250
        %s252 = sadd.s32 %s191, 6
        %s253 = sld [smem:[#allocation3 + %s252]]
        %s254 = sld [smem:[#allocation4 + %s252]]
        %s255 = scalar_lea.vmem [#allocation5], %s253
        %v256 = vld [vmem:[%s255] sm:$0x1]
        %s257 = scalar_lea.vmem [#allocation8], %s254
        %v258 = vld [vmem:[%s257] sm:$0x1]
        %v259 = vadd.f32 %v256, %v258
        %v260 = vadd.f32 %v259, %v192
        %261 = vst [vmem:[%s190 + $0x6] sm:$0x1] %v260
        %s262 = sadd.s32 %s191, 7
        %s263 = sld [smem:[#allocation3 + %s262]]
        %s264 = sld [smem:[#allocation4 + %s262]]
        %s265 = scalar_lea.vmem [#allocation5], %s263
        %v266 = vld [vmem:[%s265] sm:$0x1]
        %s267 = scalar_lea.vmem [#allocation8], %s264
        %v268 = vld [vmem:[%s267] sm:$0x1]
        %v269 = vadd.f32 %v266, %v268
        %v270 = vadd.f32 %v269, %v192
        %271 = vst [vmem:[%s190 + $0x7] sm:$0x1] %v270
        %s272 = sand.u32 %s102, 1
        %s273 = scalar_lea.sflag [#allocation7], %s272
        %s274 = sand.u32 %s102, 1
        %s275 = smul.addr %s274, 8
        %s276 = scalar_lea.vmem [#allocation10], %s275
        // Predicated region
        $region41: #{_lambda_.1} parent=31 // pred_check
          %p277 = pneg %p112
        $region42: #{_lambda_.1} parent=31 // pred_check_branch
          %279 = sbr.rel (%p277) target = $region44
        $region43: #{_lambda_.1} parent=31 // pred_region
          %s281 = ssub.s32 128, 128
          %282 = vsyncadd %s273, %s281
          %s283 = smul.addr %s31, 128
          %s284 = scalar_lea.hbm %s5, %s283
          %s286 = sshll.u32 %s276, 4
          %s287 = int_to_ptr.vmem [resolvable:$true] %s286
          %289 = dma.vmem_to_hbm [thread:$0]  %s287, 128, %s284, %s273
        $region44: #{_lambda_.1} parent=31 // pred_fallthru
          _
      $region32: #{_lambda_.1} parent=5 // pred_fallthru
        _
      %p290 = scmp.le.s32.totalorder 2, %s26
      // Predicated region
      $region45: #{_lambda_.1} parent=5 // pred_check
        %p291 = pneg %p290
      $region46: #{_lambda_.1} parent=5 // pred_check_branch
        %293 = sbr.rel (%p291) target = $region48
      $region47: #{_lambda_.1} parent=5 // pred_region
        %s294 = ssub.s32 %s26, 2
        // Predicated region
        $region49: #{_lambda_.1} parent=47 // pred_check
          %p295 = pneg %p118
        $region50: #{_lambda_.1} parent=47 // pred_check_branch
          %297 = sbr.rel (%p295) target = $region52
        $region51: #{_lambda_.1} parent=47 // pred_region
          %s298 = sand.u32 %s103, 1
          %s299 = scalar_lea.sflag [#allocation7], %s298
          %s300 = sand.u32 %s103, 1
          %s301 = smul.addr %s300, 8
          %s302 = scalar_lea.vmem [#allocation10], %s301
          %303 = dma.done %s299, 128
        $region52: #{_lambda_.1} parent=47 // pred_fallthru
          _
      $region48: #{_lambda_.1} parent=5 // pred_fallthru
        _
    $region6: #{_lambda_.1} parent=1 // loop_footer
      %s30 = sadd.s32 1, %s26
    $region7: #{_lambda_.1} parent=1 // loop_footer_branch
      %25 = sbr.rel target = $region3
    $region8: #{_lambda_.1} parent=1 // loop_exit
      _
    %304 = vsyncpa [#allocation6], 1
    %s305 = scalar_lea.sflag [#allocation6], 1
    %306 = vsyncpa %s305, 1
    %307 = vsyncpa [#allocation9], 1
    %308 = vsyncpa [#allocation7], 1
    %s309 = scalar_lea.sflag [#allocation7], 1
    %310 = vsyncpa %s309, 1

</llo_original>
